<compile_context>
chip_gen: v6e
topology: v6e:2x2x1
jax: 0.10.0
libtpu: 0.0.40
codegen_flags: <defaults>
</compile_context>

<pallas_src>
import jax
import jax.numpy as jnp
from jax.experimental import pallas as pl
from jax.experimental.pallas import tpu as pltpu


def _round_up(x, m):
    return (x + m - 1) // m * m


def _fused_fpn_predictor_kernel(x_ref, w_ref, b_ref, out_ref):
    """Single fused linear for both heads.

    x_ref:   (TM, D)      bf16 row tile of proposals
    w_ref:   (D, OUTp)    bf16 fused [cls | bbox] weight, pre-transposed
    b_ref:   (1, OUTp)    f32 fused bias row
    out_ref: (TM, OUTp)   fused [scores | bbox_deltas] output tile
    """
    acc = jnp.dot(x_ref[...], w_ref[...], preferred_element_type=jnp.float32)
    out_ref[...] = (acc + b_ref[...]).astype(out_ref.dtype)


def fpn_predictor(x, cls_w, cls_b, bbox_w, bbox_b, *, tile_m=256,
                  compute_dtype=jnp.bfloat16):
    """Pallas wrapper reproducing FPNPredictor.forward.

    Args:
      x:      (N, C, 1, 1) or (N, C) float32
      cls_w:  (num_classes, C)            -- torch Linear weight layout
      cls_b:  (num_classes,)
      bbox_w: (num_bbox_reg_classes*4, C)
      bbox_b: (num_bbox_reg_classes*4,)
    Returns:
      (scores (N, num_classes), bbox_deltas (N, num_bbox_reg_classes*4))
    """
    if x.ndim == 4:
        assert x.shape[2] == 1 and x.shape[3] == 1
        x = x.reshape(x.shape[0], -1)
    n, d = x.shape
    num_classes = cls_w.shape[0]
    num_bbox = bbox_w.shape[0]
    out = num_classes + num_bbox
    outp = _round_up(out, 128)                     # lane-dense fused output width

    # ---- parameter prep (hoist to param-load time in production) -------------
    # Fuse both heads, transpose to MXU-native (D, OUT), pad OUT only, cast bf16.
    w = jnp.concatenate([cls_w, bbox_w], axis=0).T                  # (d, out)
    w = jnp.pad(w, ((0, 0), (0, outp - out))).astype(compute_dtype)  # (d, OUTp)
    b = jnp.concatenate([cls_b, bbox_b], axis=0)
    b = jnp.pad(b, (0, outp - out)).reshape(1, outp).astype(jnp.float32)

    xc = x.astype(compute_dtype)                   # single cast, no padding pass

    # N tile: big enough to amortize grid-step overhead, clamped for tiny N.
    tm = max(8, min(tile_m, _round_up(n, 8)))
    grid = (pl.cdiv(n, tm),)

    # VMEM budget: resident weight/bias + double-buffered x / out tiles.
    elt = jnp.dtype(compute_dtype).itemsize
    vmem_need = (d * outp * elt + outp * 4
                 + 2 * tm * d * elt + 2 * tm * outp * 4)
    cp_kwargs = dict(dimension_semantics=("parallel",))
    if vmem_need > 24 * 1024 * 1024:
        # Large class counts (e.g. LVIS): raise the scoped limit, keep headroom,
        # cap at v7x's 64 MiB physical VMEM per TensorCore.
        cp_kwargs["vmem_limit_bytes"] = min(int(vmem_need * 1.5), 64 * 1024 * 1024)

    fused = pl.pallas_call(
        _fused_fpn_predictor_kernel,
        out_shape=jax.ShapeDtypeStruct((n, outp), x.dtype),
        grid=grid,
        in_specs=[
            pl.BlockSpec((tm, d), lambda i: (i, 0)),      # x streamed over N
            pl.BlockSpec((d, outp), lambda i: (0, 0)),    # weight stays resident
            pl.BlockSpec((1, outp), lambda i: (0, 0)),    # bias stays resident
        ],
        out_specs=pl.BlockSpec((tm, outp), lambda i: (i, 0)),
        compiler_params=pltpu.CompilerParams(**cp_kwargs),
    )(xc, w, b)

    # Single column slice per head; no extra row-slice pass (fused is N rows).
    scores = fused[:, :num_classes]
    bbox_deltas = fused[:, num_classes:out]
    return scores, bbox_deltas


if __name__ == "__main__":
    key = jax.random.PRNGKey(0)
    k_x, k_cls_w, k_bbox_w = jax.random.split(key, 3)

    # Small shapes consistent with the module's forward.
    batch = 8
    in_channels = 32                      # representation_size (EMBEDDING_INIT=False)
    num_classes = 16
    num_bbox_reg_classes = num_classes    # CLS_AGNOSTIC_BBOX_REG=False

    # Deterministic parameter init mirroring the module's __init__:
    #   cls_score: normal(std=0.01) weight, zero bias
    #   bbox_pred: normal(std=0.001) weight, zero bias
    cls_w = 0.01 * jax.random.normal(k_cls_w, (num_classes, in_channels), jnp.float32)
    cls_b = jnp.zeros((num_classes,), jnp.float32)
    bbox_w = 0.001 * jax.random.normal(
        k_bbox_w, (num_bbox_reg_classes * 4, in_channels), jnp.float32)
    bbox_b = jnp.zeros((num_bbox_reg_classes * 4,), jnp.float32)

    # 4-D NCHW input with spatial 1x1, as the forward expects.
    x = jax.random.normal(k_x, (batch, in_channels, 1, 1), jnp.float32)

    scores, bbox_deltas = fpn_predictor(x, cls_w, cls_b, bbox_w, bbox_b)
    jax.block_until_ready((scores, bbox_deltas))

    # Reference check in plain JAX (f32); bf16 MXU inputs -> loosened tolerance.
    x2 = x.reshape(batch, -1)
    ref_scores = x2 @ cls_w.T + cls_b
    ref_bbox = x2 @ bbox_w.T + bbox_b
    assert scores.shape == (batch, num_classes)
    assert bbox_deltas.shape == (batch, num_bbox_reg_classes * 4)
    assert jnp.allclose(scores, ref_scores, atol=1e-2, rtol=1e-2)
    assert jnp.allclose(bbox_deltas, ref_bbox, atol=1e-2, rtol=1e-2)

    print("KERNEL_OK")
</pallas_src>

<mosaic_0001>
module attributes {stable_mosaic.version = 11 : i64} {
  func.func @_fused_fpn_predictor_kernel(%arg0: i32, %arg1: memref<8x32xbf16, #tpu.memory_space<vmem>>, %arg2: memref<32x128xbf16, #tpu.memory_space<vmem>>, %arg3: memref<1x128xf32, #tpu.memory_space<vmem>>, %arg4: memref<8x128xf32, #tpu.memory_space<vmem>>) attributes {dimension_semantics = [#tpu.dimension_semantics<parallel>], iteration_bounds = array<i64: 1>, scalar_prefetch = 0 : i64, scratch_operands = 0 : i64, tpu.core_type = #tpu.core_type<tc>, window_params = [{transform_indices = @transform_0, window_bounds = array<i64: 8, 32>}, {pipeline_mode = #tpu.pipeline_mode<synchronous>, transform_indices = @transform_1, window_bounds = array<i64: 32, 128>}, {pipeline_mode = #tpu.pipeline_mode<synchronous>, transform_indices = @transform_2, window_bounds = array<i64: 1, 128>}, {transform_indices = @transform_3, window_bounds = array<i64: 8, 128>}]} {
    %c0 = arith.constant 0 : index
    %c0_0 = arith.constant 0 : index
    %0 = vector.load %arg1[%c0, %c0_0] : memref<8x32xbf16, #tpu.memory_space<vmem>>, vector<8x32xbf16>
    %c0_1 = arith.constant 0 : index
    %c0_2 = arith.constant 0 : index
    %1 = vector.load %arg2[%c0_1, %c0_2] : memref<32x128xbf16, #tpu.memory_space<vmem>>, vector<32x128xbf16>
    %cst = arith.constant dense<0.000000e+00> : vector<8x128xf32>
    %2 = tpu.matmul %0, %1, %cst {dimension_numbers = #tpu.dot_dimension_numbers<[1], [0], [0], [1], [0, 0, 1, 1], [], []>} : vector<8x32xbf16>, vector<32x128xbf16>, vector<8x128xf32> -> vector<8x128xf32>
    %c0_3 = arith.constant 0 : index
    %c0_4 = arith.constant 0 : index
    %3 = vector.load %arg3[%c0_3, %c0_4] : memref<1x128xf32, #tpu.memory_space<vmem>>, vector<1x128xf32>
    %4 = vector.broadcast %3 : vector<1x128xf32> to vector<8x128xf32>
    %5 = arith.addf %2, %4 : vector<8x128xf32>
    %c0_5 = arith.constant 0 : index
    %c0_6 = arith.constant 0 : index
    %6 = vector.load %arg4[%c0_5, %c0_6] : memref<8x128xf32, #tpu.memory_space<vmem>>, vector<8x128xf32>
    tpu.vector_store %arg4[%c0_5, %c0_6], %5 {strides = array<i32>} : memref<8x128xf32, #tpu.memory_space<vmem>>, vector<8x128xf32>,
    return
  }
  func.func @transform_0(%arg0: i32) -> (i32, i32) {
    %c0_i32 = arith.constant 0 : i32
    %c0_i32_0 = arith.constant 0 : i32
    return %arg0, %c0_i32 : i32, i32
  }
  func.func @transform_1(%arg0: i32) -> (i32, i32) {
    %c0_i32 = arith.constant 0 : i32
    %c0_i32_0 = arith.constant 0 : i32
    %c0_i32_1 = arith.constant 0 : i32
    return %c0_i32, %c0_i32_0 : i32, i32
  }
  func.func @transform_2(%arg0: i32) -> (i32, i32) {
    %c0_i32 = arith.constant 0 : i32
    %c0_i32_0 = arith.constant 0 : i32
    %c0_i32_1 = arith.constant 0 : i32
    return %c0_i32, %c0_i32_0 : i32, i32
  }
  func.func @transform_3(%arg0: i32) -> (i32, i32) {
    %c0_i32 = arith.constant 0 : i32
    %c0_i32_0 = arith.constant 0 : i32
    return %arg0, %c0_i32 : i32, i32
  }
}

</mosaic_0001>

<llo_original>
// kernel: tpu_custom_call.1
$region0: #{tpu_custom_call.1}
  #allocation0 [shape = 'u32[]', space=smem, size = 0x4, offset = 0x4, fixed_abs, tag = 'smem constant byte address 0x4 - core index']
  #allocation1 [shape = 'u32[144,128]{1,0:T(1,128)}', space=vmem, size = 0x12000, scoped, tag = 'internal scratch']
  %s0 = inlined_call_operand.hbm [shape: bf16[8,32], index: 0, kind: input, shape index: {}]
  %s1 = inlined_call_operand.hbm [shape: bf16[32,128], index: 1, kind: input, shape index: {}]
  %s2 = inlined_call_operand.vmem [shape: f32[1,128], index: 2, kind: input, shape index: {}]
  %s3 = inlined_call_operand.hbm [shape: f32[8,128], index: 3, kind: output, shape index: {}]
  %s4 = sld [smem:[#allocation0]]
  $region30: #{tpu_custom_call.1} parent=0
    _
  %s6 = ssub.s32 1, %s4
  %s7 = scalar_select 0, %s6, %s4
  $region1: #{tpu_custom_call.1} parent=0
    #allocation2 [shape = 'u8[2048]{0}', space=vmem, size = 0x800, scoped, tag = 'input window, operand 0, single buffered']
    #allocation3 [shape = 's32[1]{0}', space=sflag, size = 0x4, scoped, tag = 'scoped memory for tpu_custom_call.1']
    #allocation4 [shape = 's32[1]{0}', space=sflag, size = 0x4, scoped, tag = 'scoped memory for tpu_custom_call.1']
    #allocation5 [shape = 'u8[8192]{0}', space=vmem, size = 0x2000, scoped, tag = 'input window, operand 1, single buffered']
    #allocation6 [shape = 's32[1]{0}', space=sflag, size = 0x4, scoped, tag = 'scoped memory for tpu_custom_call.1']
    #allocation7 [shape = 'u8[4096]{0}', space=vmem, size = 0x1000, scoped, tag = 'output window, operand 0, single buffered']
    %8 = vsyncpa [#allocation3], 0
    %9 = vsyncpa [#allocation6], 0
    %10 = vsyncpa [#allocation4], 0
    // Predicated region
    $region2: #{tpu_custom_call.1} parent=1 // pred_check
      _
    $region3: #{tpu_custom_call.1} parent=1 // pred_check_branch
      %12 = sbr.rel (0) target = $region5
    $region4: #{tpu_custom_call.1} parent=1 // pred_region
      %s14 = ssub.s32 64, 64
      %15 = vsyncadd [#allocation3], %s14
      %s17 = sshll.u32 [#allocation2], 4
      %s18 = int_to_ptr.vmem [resolvable:$true] %s17
      %20 = dma.hbm_to_vmem [thread:$0]  %s0, 64, %s18, [#allocation3]
    $region5: #{tpu_custom_call.1} parent=1 // pred_fallthru
      _
    // Predicated region
    $region6: #{tpu_custom_call.1} parent=1 // pred_check
      _
    $region7: #{tpu_custom_call.1} parent=1 // pred_check_branch
      %22 = sbr.rel (0) target = $region9
    $region8: #{tpu_custom_call.1} parent=1 // pred_region
      %s24 = ssub.s32 256, 256
      %25 = vsyncadd [#allocation6], %s24
      %s26 = sshll.u32 [#allocation5], 4
      %s27 = int_to_ptr.vmem [resolvable:$true] %s26
      %32 = dma.hbm_to_vmem [thread:$0]  %s1, 256, %s27, [#allocation6], 64, 64, 4
    $region9: #{tpu_custom_call.1} parent=1 // pred_fallthru
      _
    // Predicated region
    $region10: #{tpu_custom_call.1} parent=1 // pred_check
      _
    $region11: #{tpu_custom_call.1} parent=1 // pred_check_branch
      %34 = sbr.rel (0) target = $region13
    $region12: #{tpu_custom_call.1} parent=1 // pred_region
      _
    $region13: #{tpu_custom_call.1} parent=1 // pred_fallthru
      _
    // Predicated region
    $region14: #{tpu_custom_call.1} parent=1 // pred_check
      _
    $region15: #{tpu_custom_call.1} parent=1 // pred_check_branch
      %36 = sbr.rel (0) target = $region17
    $region16: #{tpu_custom_call.1} parent=1 // pred_region
      %37 = dma.done [#allocation3], 64
    $region17: #{tpu_custom_call.1} parent=1 // pred_fallthru
      _
    // Predicated region
    $region18: #{tpu_custom_call.1} parent=1 // pred_check
      _
    $region19: #{tpu_custom_call.1} parent=1 // pred_check_branch
      %39 = sbr.rel (0) target = $region21
    $region20: #{tpu_custom_call.1} parent=1 // pred_region
      %40 = dma.done [#allocation6], 256
    $region21: #{tpu_custom_call.1} parent=1 // pred_fallthru
      _
    %v42 = vld [vmem:[#allocation2] sm:$0xf]
    %v43 = vld [vmem:[#allocation5] sm:$0xf]
    %v44 = vld [vmem:[#allocation5 + $0x4] sm:$0xf]
    %v45 = vld [vmem:[#allocation5 + $0x8] sm:$0xf]
    %v46 = vld [vmem:[#allocation5 + $0xc] sm:$0xf]
    %v47 = vld [vmem:[%s2] sm:$0x1]
    %v49 = vlaneseq
    %v50 = vshrl.u32 %v49, 7
    %v51 = vsub.s32 0, %v50
    %v52 = vrot.slane %v47, %v51
    %v58 = vunpack.c.l.b16 %v43
    %v59 = vunpack.c.l.b16 %v44
    %v60 = vunpack.c.l.b16 %v45
    %v61 = vunpack.c.l.b16 %v46
    %v62 = vpack.c.b16 %v59, %v58
    %v63 = vpack.c.b16 %v61, %v60
    %vm66 = vcmask 261120
    %v68 = vsel %vm66, %v42, 0
    %70 = vmatprep.subr.bf16.mxu0 0
    %71 = vmatpush1.bf16.msra.mxu0 0
    %72 = vmatprep.subr.bf16.mxu0 0
    %73 = vmatpush1.bf16.msra.mxu0 0
    %74 = vmatprep.subr.bf16.mxu0 0
    %75 = vmatpush1.bf16.msra.mxu0 0
    %76 = vmatprep.subr.bf16.mxu0 0
    %77 = vmatpush1.bf16.msra.mxu0 0
    %78 = vmatprep.subr.bf16.mxu0 0
    %79 = vmatpush1.bf16.msra.mxu0 0
    %80 = vmatprep.subr.bf16.mxu0 0
    %81 = vmatpush1.bf16.msra.mxu0 0
    %82 = vmatprep.subr.bf16.mxu0 0
    %83 = vmatpush1.bf16.msra.mxu0 %v63
    %84 = vmatprep.subr.bf16.mxu0 0
    %85 = vmatpush1.bf16.msra.mxu0 %v62
    %86 = vmatprep.subr.bf16.mxu0 0
    %87 = vmatpush2.bf16.msra.mxu0 0
    %88 = vmatprep.subr.bf16.mxu0 0
    %89 = vmatpush2.bf16.msra.mxu0 0
    %90 = vmatprep.subr.bf16.mxu0 0
    %91 = vmatpush2.bf16.msra.mxu0 0
    %92 = vmatprep.subr.bf16.mxu0 0
    %93 = vmatpush2.bf16.msra.mxu0 0
    %94 = vmatprep.subr.bf16.mxu0 0
    %95 = vmatpush2.bf16.msra.mxu0 0
    %96 = vmatprep.subr.bf16.mxu0 0
    %97 = vmatpush2.bf16.msra.mxu0 0
    %98 = vmatprep.subr.bf16.mxu0 0
    %99 = vmatpush2.bf16.msra.mxu0 0
    %100 = vmatprep.subr.bf16.mxu0 0
    %101 = vmatpush2.bf16.msra.mxu0 0
    %102 = vmatprep.mubr.bf16.mxu0 0
    %103 = vmatmul.mubr.bf16.gmra.mxu0 %v68
    %v104 = vpop.f32.mrf.mxu0
    %v105 = vadd.f32 %v52, %v104
    %v106 = vpop.f32.mrf.mxu0
    %v107 = vpop.f32.mrf.mxu0
    %v108 = vpop.f32.mrf.mxu0
    %109 = vdwg.mxu0
    %110 = vst [vmem:[#allocation7] sm:$0xff] %v105
    // Predicated region
    $region22: #{tpu_custom_call.1} parent=1 // pred_check
      _
    $region23: #{tpu_custom_call.1} parent=1 // pred_check_branch
      %112 = sbr.rel (0) target = $region25
    $region24: #{tpu_custom_call.1} parent=1 // pred_region
      %s114 = ssub.s32 128, 128
      %115 = vsyncadd [#allocation4], %s114
      %s117 = sshll.u32 [#allocation7], 4
      %s118 = int_to_ptr.vmem [resolvable:$true] %s117
      %120 = dma.vmem_to_hbm [thread:$0]  %s118, 128, %s3, [#allocation4]
    $region25: #{tpu_custom_call.1} parent=1 // pred_fallthru
      _
    // Predicated region
    $region26: #{tpu_custom_call.1} parent=1 // pred_check
      _
    $region27: #{tpu_custom_call.1} parent=1 // pred_check_branch
      %122 = sbr.rel (0) target = $region29
    $region28: #{tpu_custom_call.1} parent=1 // pred_region
      %123 = dma.done [#allocation4], 128
    $region29: #{tpu_custom_call.1} parent=1 // pred_fallthru
      _
    %124 = vsyncpa [#allocation3], 1
    %125 = vsyncpa [#allocation6], 1
    %126 = vsyncpa [#allocation4], 1

</llo_original>
